<compile_context>
chip_gen: v5e
topology: v5e:2x2
jax: 0.10.0
libtpu: 0.0.40
codegen_flags: <defaults>
</compile_context>

<pallas_src>
import math
from functools import partial

import jax
import jax.numpy as jnp
from jax.experimental import pallas as pl
from jax.experimental.pallas import tpu as pltpu


# ----------------------------- T5_CONFIG -----------------------------------
D_MODEL = 32
D_KV = 8
NUM_HEADS = 4
INNER_DIM = NUM_HEADS * D_KV            # 32
REL_NUM_BUCKETS = 32
REL_MAX_DISTANCE = 128
DROPOUT_RATE = 0.0                       # eval mode -> dropout is identity


# --------------------- relative position bias (glue) ------------------------
def _relative_position_bucket(relative_position, bidirectional, num_buckets,
                              max_distance):
    relative_buckets = jnp.zeros_like(relative_position)
    if bidirectional:
        num_buckets = num_buckets // 2
        relative_buckets = relative_buckets + (
            (relative_position > 0).astype(jnp.int32) * num_buckets)
        relative_position = jnp.abs(relative_position)
    else:
        relative_position = -jnp.minimum(relative_position,
                                         jnp.zeros_like(relative_position))
    max_exact = num_buckets // 2
    is_small = relative_position < max_exact
    # Guard log(0): the is_small branch masks those entries anyway; the max()
    # avoids -inf -> int32 cast of the selected-out branch (review concern).
    rp_safe = jnp.maximum(relative_position, 1).astype(jnp.float32)
    rel_if_large = max_exact + (
        jnp.log(rp_safe / max_exact)
        / math.log(max_distance / max_exact)
        * (num_buckets - max_exact)).astype(jnp.int32)
    rel_if_large = jnp.minimum(rel_if_large,
                               jnp.full_like(rel_if_large, num_buckets - 1))
    relative_buckets = relative_buckets + jnp.where(
        is_small, relative_position, rel_if_large)
    return relative_buckets


def relative_position_bias(query_length, key_length, rel_emb,
                           bidirectional=True):
    # rel_emb: (num_buckets, num_heads)
    context_position = jnp.arange(query_length, dtype=jnp.int32)[:, None]
    memory_position = jnp.arange(key_length, dtype=jnp.int32)[None, :]
    relative_position = memory_position - context_position       # (q, k)
    buckets = _relative_position_bucket(relative_position, bidirectional,
                                        REL_NUM_BUCKETS, REL_MAX_DISTANCE)
    values = rel_emb[buckets]                                      # (q, k, H)
    values = jnp.transpose(values, (2, 0, 1))[None]                # (1, H, q, k)
    return values


# ------------------------------ Pallas kernel -------------------------------
def mha_kernel(x_ref, wqkv_ref, wo_ref, bias_ref, o_ref, *, batch, seq):
    # x_ref:    (B, S, D_MODEL)
    # wqkv_ref: (H, D_MODEL, 3*D_KV)  fused per-head Wq|Wk|Wv
    # wo_ref:   (H, D_KV, D_MODEL)    per-head rows of Wo
    # bias_ref: (H, S, S)             relative position bias
    # o_ref:    (B, S, D_MODEL)
    B, S, H, DK, D = batch, seq, NUM_HEADS, D_KV, D_MODEL
    BH = B * H

    x = x_ref[...]                                           # (B, S, D)

    # Heads live on the leading batch dim: broadcast tokens / weights over the
    # (B, H) product so every contraction below is a canonical leading-batch
    # 3-D matmul.  All reshapes here touch only leading (non-tiled) dims.
    xb = jnp.broadcast_to(x[:, None], (B, H, S, D)).reshape(BH, S, D)
    wqkv = jnp.broadcast_to(wqkv_ref[...][None],
                            (B, H, D, 3 * DK)).reshape(BH, D, 3 * DK)

    # Fused Q/K/V projection: one batched MXU contraction, then static split.
    qkv = jnp.einsum('bsd,bde->bse', xb, wqkv,
                     preferred_element_type=jnp.float32)     # (B*H, S, 3*DK)
    q = qkv[:, :, 0 * DK:1 * DK]
    k = qkv[:, :, 1 * DK:2 * DK]
    v = qkv[:, :, 2 * DK:3 * DK]

    # Scores: contract the last dims of both operands directly (no k.T).
    # T5 does NOT scale by 1/sqrt(d_kv).
    bias = jnp.broadcast_to(bias_ref[...][None], (B, H, S, S)).reshape(BH, S, S)
    scores = jnp.einsum('bqd,bkd->bqk', q, k,
                        preferred_element_type=jnp.float32) + bias

    # Numerically stable softmax; denominator reciprocal runs on the EUP.
    scores = scores - jnp.max(scores, axis=-1, keepdims=True)
    e = jnp.exp(scores)
    weights = e * pl.reciprocal(jnp.sum(e, axis=-1, keepdims=True), approx=True)
    # (dropout is identity in eval mode)

    ctx = jnp.einsum('bqk,bkd->bqd', weights, v,
                     preferred_element_type=jnp.float32)     # (B*H, S, DK)

    # Output projection: per-head slice of Wo, then sum over heads.  This is
    # exactly concat(heads) @ Wo, without the head->lane concat/relayout.
    wo = jnp.broadcast_to(wo_ref[...][None], (B, H, DK, D)).reshape(BH, DK, D)
    part = jnp.einsum('bsd,bdm->bsm', ctx, wo,
                      preferred_element_type=jnp.float32)    # (B*H, S, D)
    out = jnp.sum(part.reshape(B, H, S, D), axis=1)          # (B, S, D)

    o_ref[...] = out.astype(o_ref.dtype)


def multi_head_attention(hidden_states, wq, wk, wv, wo, rel_emb,
                         is_decoder=False):
    """Returns (attn_output, position_bias, present_key_value)."""
    B, S, D = hidden_states.shape
    assert D == D_MODEL

    # Relative-position bias (setup glue, plain JAX): (1, H, S, S).
    position_bias = relative_position_bias(
        S, S, rel_emb, bidirectional=not is_decoder).astype(jnp.float32)

    # Fuse Q/K/V projection weights per head: (H, D_MODEL, 3*D_KV).
    def per_head(w):                      # (D_MODEL, H*D_KV) -> (H, D_MODEL, D_KV)
        return w.reshape(D_MODEL, NUM_HEADS, D_KV).transpose(1, 0, 2)

    wqkv_h = jnp.concatenate([per_head(wq), per_head(wk), per_head(wv)], axis=-1)
    wo_h = wo.reshape(NUM_HEADS, D_KV, D_MODEL)   # per-head rows of Wo

    kernel = partial(mha_kernel, batch=B, seq=S)
    out = pl.pallas_call(
        kernel,
        out_shape=jax.ShapeDtypeStruct((B, S, D_MODEL), hidden_states.dtype),
        # Single invocation (no grid): the whole problem is one VMEM-resident
        # block, so there is no per-step overhead, no duplicated weight/bias
        # DMAs, and no double-buffering of grid-invariant inputs.
        in_specs=[pl.BlockSpec(memory_space=pltpu.MemorySpace.VMEM)] * 4,
        out_specs=pl.BlockSpec(memory_space=pltpu.MemorySpace.VMEM),
    )(hidden_states, wqkv_h, wo_h, position_bias[0])

    return out, position_bias, None


# ------------------------------ JAX reference -------------------------------
def ref_mha(x, wq, wk, wv, wo, bias):
    B, S, D = x.shape
    q = (x @ wq).reshape(B, S, NUM_HEADS, D_KV).transpose(0, 2, 1, 3)
    k = (x @ wk).reshape(B, S, NUM_HEADS, D_KV).transpose(0, 2, 1, 3)
    v = (x @ wv).reshape(B, S, NUM_HEADS, D_KV).transpose(0, 2, 1, 3)
    scores = jnp.einsum('bhqd,bhkd->bhqk', q, k) + bias
    w = jax.nn.softmax(scores, axis=-1)
    ctx = jnp.einsum('bhqk,bhkd->bhqd', w, v)
    ctx = ctx.transpose(0, 2, 1, 3).reshape(B, S, NUM_HEADS * D_KV)
    return ctx @ wo


# ----------------------------------- main ------------------------------------
if __name__ == "__main__":
    key = jax.random.PRNGKey(0)
    k_x, k_q, k_k, k_v, k_o, k_e = jax.random.split(key, 6)

    B, S = 2, 8
    x = jax.random.normal(k_x, (B, S, D_MODEL), dtype=jnp.float32)

    # deterministic parameter init (shapes from nn.Linear / nn.Embedding)
    wq = jax.random.normal(k_q, (D_MODEL, INNER_DIM), dtype=jnp.float32) * 0.05
    wk = jax.random.normal(k_k, (D_MODEL, INNER_DIM), dtype=jnp.float32) * 0.05
    wv = jax.random.normal(k_v, (D_MODEL, INNER_DIM), dtype=jnp.float32) * 0.05
    wo = jax.random.normal(k_o, (INNER_DIM, D_MODEL), dtype=jnp.float32) * 0.05
    rel_emb = jax.random.normal(
        k_e, (REL_NUM_BUCKETS, NUM_HEADS), dtype=jnp.float32) * 0.1

    out, pos_bias, present = multi_head_attention(x, wq, wk, wv, wo, rel_emb)
    out = jax.block_until_ready(out)

    ref = ref_mha(x, wq, wk, wv, wo, pos_bias)
    assert out.shape == (B, S, D_MODEL)
    assert present is None
    # Tolerance is looser than v1's 1e-5 solely because the softmax denominator
    # now uses the approximate EUP reciprocal (pl.reciprocal(..., approx=True));
    # real bugs (wrong head mapping / bias / softmax) would show errors >> 5e-3.
    assert jnp.allclose(out, ref, atol=5e-3, rtol=5e-3), \
        float(jnp.max(jnp.abs(out - ref)))

    print("KERNEL_OK")
</pallas_src>

<mosaic_0001>
module attributes {stable_mosaic.version = 11 : i64} {
  func.func @mha_kernel(%arg0: memref<2x8x32xf32, #tpu.memory_space<vmem>>, %arg1: memref<4x32x24xf32, #tpu.memory_space<vmem>>, %arg2: memref<4x8x32xf32, #tpu.memory_space<vmem>>, %arg3: memref<4x8x8xf32, #tpu.memory_space<vmem>>, %arg4: memref<2x8x32xf32, #tpu.memory_space<vmem>>) attributes {dimension_semantics = [], scalar_prefetch = 0 : i64, scratch_operands = 0 : i64, tpu.core_type = #tpu.core_type<tc>} {
    %c0 = arith.constant 0 : index
    %c0_0 = arith.constant 0 : index
    %c0_1 = arith.constant 0 : index
    %0 = vector.load %arg0[%c0, %c0_0, %c0_1] : memref<2x8x32xf32, #tpu.memory_space<vmem>>, vector<2x8x32xf32>
    %1 = vector.shape_cast %0 : vector<2x8x32xf32> to vector<2x1x8x32xf32>
    %2 = vector.shape_cast %1 : vector<2x1x8x32xf32> to vector<2x1x8x32xf32>
    %3 = vector.broadcast %2 : vector<2x1x8x32xf32> to vector<2x4x8x32xf32>
    %4 = vector.shape_cast %3 : vector<2x4x8x32xf32> to vector<8x8x32xf32>
    %c0_2 = arith.constant 0 : index
    %c0_3 = arith.constant 0 : index
    %c0_4 = arith.constant 0 : index
    %5 = vector.load %arg1[%c0_2, %c0_3, %c0_4] : memref<4x32x24xf32, #tpu.memory_space<vmem>>, vector<4x32x24xf32>
    %6 = vector.shape_cast %5 : vector<4x32x24xf32> to vector<1x4x32x24xf32>
    %7 = vector.shape_cast %6 : vector<1x4x32x24xf32> to vector<1x4x32x24xf32>
    %8 = vector.broadcast %7 : vector<1x4x32x24xf32> to vector<2x4x32x24xf32>
    %9 = vector.shape_cast %8 : vector<2x4x32x24xf32> to vector<8x32x24xf32>
    "tpu.trace_start"() <{level = 10 : i32, message = "bsd,bde->bse"}> : () -> ()
    %cst = arith.constant dense<0.000000e+00> : vector<8x8x24xf32>
    %10 = tpu.matmul %4, %9, %cst {dimension_numbers = #tpu.dot_dimension_numbers<[2], [1], [1], [2], [0, 0, 0, 1, 1, 2], [0], [0]>} : vector<8x8x32xf32>, vector<8x32x24xf32>, vector<8x8x24xf32> -> vector<8x8x24xf32>
    "tpu.trace_stop"() : () -> ()
    %11 = vector.extract_strided_slice %10 {offsets = [0, 0, 0], sizes = [8, 8, 8], strides = [1, 1, 1]} : vector<8x8x24xf32> to vector<8x8x8xf32>
    %12 = vector.extract_strided_slice %10 {offsets = [0, 0, 8], sizes = [8, 8, 8], strides = [1, 1, 1]} : vector<8x8x24xf32> to vector<8x8x8xf32>
    %13 = vector.extract_strided_slice %10 {offsets = [0, 0, 16], sizes = [8, 8, 8], strides = [1, 1, 1]} : vector<8x8x24xf32> to vector<8x8x8xf32>
    %c0_5 = arith.constant 0 : index
    %c0_6 = arith.constant 0 : index
    %c0_7 = arith.constant 0 : index
    %14 = vector.load %arg3[%c0_5, %c0_6, %c0_7] : memref<4x8x8xf32, #tpu.memory_space<vmem>>, vector<4x8x8xf32>
    %15 = vector.shape_cast %14 : vector<4x8x8xf32> to vector<1x4x8x8xf32>
    %16 = vector.shape_cast %15 : vector<1x4x8x8xf32> to vector<1x4x8x8xf32>
    %17 = vector.broadcast %16 : vector<1x4x8x8xf32> to vector<2x4x8x8xf32>
    %18 = vector.shape_cast %17 : vector<2x4x8x8xf32> to vector<8x8x8xf32>
    "tpu.trace_start"() <{level = 10 : i32, message = "bqd,bkd->bqk"}> : () -> ()
    %cst_8 = arith.constant dense<0.000000e+00> : vector<8x8x8xf32>
    %19 = tpu.matmul %11, %12, %cst_8 {dimension_numbers = #tpu.dot_dimension_numbers<[2], [2], [1], [1], [0, 0, 0, 1, 1, 1], [0], [0]>} : vector<8x8x8xf32>, vector<8x8x8xf32>, vector<8x8x8xf32> -> vector<8x8x8xf32>
    "tpu.trace_stop"() : () -> ()
    %20 = arith.addf %19, %18 : vector<8x8x8xf32>
    %cst_9 = arith.constant dense<0xFF800000> : vector<8x8xf32>
    %21 = vector.multi_reduction <maximumf>, %20, %cst_9 [2] : vector<8x8x8xf32> to vector<8x8xf32>
    %22 = vector.shape_cast %21 : vector<8x8xf32> to vector<8x8x1xf32>
    %23 = vector.broadcast %22 : vector<8x8x1xf32> to vector<8x8x8xf32>
    %24 = arith.subf %20, %23 : vector<8x8x8xf32>
    %25 = math.exp %24 : vector<8x8x8xf32>
    %cst_10 = arith.constant dense<0.000000e+00> : vector<8x8xf32>
    %26 = vector.multi_reduction <add>, %25, %cst_10 [2] : vector<8x8x8xf32> to vector<8x8xf32>
    %27 = vector.shape_cast %26 : vector<8x8xf32> to vector<8x8x1xf32>
    %28 = tpu.reciprocal %27 {approx = true} : vector<8x8x1xf32> -> vector<8x8x1xf32>
    %29 = vector.broadcast %28 : vector<8x8x1xf32> to vector<8x8x8xf32>
    %30 = arith.mulf %25, %29 : vector<8x8x8xf32>
    "tpu.trace_start"() <{level = 10 : i32, message = "bqk,bkd->bqd"}> : () -> ()
    %cst_11 = arith.constant dense<0.000000e+00> : vector<8x8x8xf32>
    %31 = tpu.matmul %30, %13, %cst_11 {dimension_numbers = #tpu.dot_dimension_numbers<[2], [1], [1], [2], [0, 0, 0, 1, 1, 2], [0], [0]>} : vector<8x8x8xf32>, vector<8x8x8xf32>, vector<8x8x8xf32> -> vector<8x8x8xf32>
    "tpu.trace_stop"() : () -> ()
    %c0_12 = arith.constant 0 : index
    %c0_13 = arith.constant 0 : index
    %c0_14 = arith.constant 0 : index
    %32 = vector.load %arg2[%c0_12, %c0_13, %c0_14] : memref<4x8x32xf32, #tpu.memory_space<vmem>>, vector<4x8x32xf32>
    %33 = vector.shape_cast %32 : vector<4x8x32xf32> to vector<1x4x8x32xf32>
    %34 = vector.shape_cast %33 : vector<1x4x8x32xf32> to vector<1x4x8x32xf32>
    %35 = vector.broadcast %34 : vector<1x4x8x32xf32> to vector<2x4x8x32xf32>
    %36 = vector.shape_cast %35 : vector<2x4x8x32xf32> to vector<8x8x32xf32>
    "tpu.trace_start"() <{level = 10 : i32, message = "bsd,bdm->bsm"}> : () -> ()
    %cst_15 = arith.constant dense<0.000000e+00> : vector<8x8x32xf32>
    %37 = tpu.matmul %31, %36, %cst_15 {dimension_numbers = #tpu.dot_dimension_numbers<[2], [1], [1], [2], [0, 0, 0, 1, 1, 2], [0], [0]>} : vector<8x8x8xf32>, vector<8x8x32xf32>, vector<8x8x32xf32> -> vector<8x8x32xf32>
    "tpu.trace_stop"() : () -> ()
    %38 = vector.shape_cast %37 : vector<8x8x32xf32> to vector<2x4x8x32xf32>
    %cst_16 = arith.constant dense<0.000000e+00> : vector<2x8x32xf32>
    %39 = vector.multi_reduction <add>, %38, %cst_16 [1] : vector<2x4x8x32xf32> to vector<2x8x32xf32>
    %c0_17 = arith.constant 0 : index
    %c0_18 = arith.constant 0 : index
    %c0_19 = arith.constant 0 : index
    %40 = vector.load %arg4[%c0_17, %c0_18, %c0_19] : memref<2x8x32xf32, #tpu.memory_space<vmem>>, vector<2x8x32xf32>
    tpu.vector_store %arg4[%c0_17, %c0_18, %c0_19], %39 {strides = array<i32>} : memref<2x8x32xf32, #tpu.memory_space<vmem>>, vector<2x8x32xf32>,
    return
  }
}

</mosaic_0001>

<llo_original>
// kernel: tpu_custom_call.1
$region0: #{tpu_custom_call.1}
  #allocation0 [shape = 'u32[]', space=smem, size = 0x4, offset = 0x4, fixed_abs, tag = 'smem constant byte address 0x4 - core index']
  #allocation1 [shape = 'u32[72,128]{1,0:T(1,128)}', space=vmem, size = 0x9000, scoped, tag = 'internal scratch']
  %s0 = inlined_call_operand.vmem [shape: f32[2,8,32], index: 0, kind: input, shape index: {}]
  %s1 = inlined_call_operand.vmem [shape: f32[4,32,24], index: 1, kind: input, shape index: {}]
  %s2 = inlined_call_operand.vmem [shape: f32[4,8,32], index: 2, kind: input, shape index: {}]
  %s3 = inlined_call_operand.vmem [shape: f32[4,8,8], index: 3, kind: input, shape index: {}]
  %s4 = inlined_call_operand.hbm [shape: f32[2,8,32], index: 4, kind: output, shape index: {}]
  %s5 = sld [smem:[#allocation0]]
  $region26: #{tpu_custom_call.1} parent=0
    _
  %s7 = ssub.s32 1, %s5
  %s8 = scalar_select 0, %s7, %s5
  $region1: #{tpu_custom_call.1} parent=0
    #allocation2 [shape = 'u8[8192]{0}', space=vmem, size = 0x2000, scoped, tag = 'output window, operand 0, single buffered']
    #allocation3 [shape = 's32[1]{0}', space=sflag, size = 0x4, scoped, tag = 'scoped memory for tpu_custom_call.1']
    %9 = vsyncpa [#allocation3], 0
    // Predicated region
    $region2: #{tpu_custom_call.1} parent=1 // pred_check
      _
    $region3: #{tpu_custom_call.1} parent=1 // pred_check_branch
      %11 = sbr.rel (0) target = $region5
    $region4: #{tpu_custom_call.1} parent=1 // pred_region
      _
    $region5: #{tpu_custom_call.1} parent=1 // pred_fallthru
      _
    // Predicated region
    $region6: #{tpu_custom_call.1} parent=1 // pred_check
      _
    $region7: #{tpu_custom_call.1} parent=1 // pred_check_branch
      %13 = sbr.rel (0) target = $region9
    $region8: #{tpu_custom_call.1} parent=1 // pred_region
      _
    $region9: #{tpu_custom_call.1} parent=1 // pred_fallthru
      _
    // Predicated region
    $region10: #{tpu_custom_call.1} parent=1 // pred_check
      _
    $region11: #{tpu_custom_call.1} parent=1 // pred_check_branch
      %15 = sbr.rel (0) target = $region13
    $region12: #{tpu_custom_call.1} parent=1 // pred_region
      _
    $region13: #{tpu_custom_call.1} parent=1 // pred_fallthru
      _
    // Predicated region
    $region14: #{tpu_custom_call.1} parent=1 // pred_check
      _
    $region15: #{tpu_custom_call.1} parent=1 // pred_check_branch
      %17 = sbr.rel (0) target = $region17
    $region16: #{tpu_custom_call.1} parent=1 // pred_region
      _
    $region17: #{tpu_custom_call.1} parent=1 // pred_fallthru
      _
    %v18 = vld [vmem:[%s0] sm:$0xff]
    %v19 = vld [vmem:[%s0 + $0x8] sm:$0xff]
    %v20 = vld [vmem:[%s1] sm:$0xff]
    %v21 = vld [vmem:[%s1 + $0x8] sm:$0xff]
    %v22 = vld [vmem:[%s1 + $0x10] sm:$0xff]
    %v23 = vld [vmem:[%s1 + $0x18] sm:$0xff]
    %v24 = vld [vmem:[%s1 + $0x20] sm:$0xff]
    %v25 = vld [vmem:[%s1 + $0x28] sm:$0xff]
    %v26 = vld [vmem:[%s1 + $0x30] sm:$0xff]
    %v27 = vld [vmem:[%s1 + $0x38] sm:$0xff]
    %v28 = vld [vmem:[%s1 + $0x40] sm:$0xff]
    %v29 = vld [vmem:[%s1 + $0x48] sm:$0xff]
    %v30 = vld [vmem:[%s1 + $0x50] sm:$0xff]
    %v31 = vld [vmem:[%s1 + $0x58] sm:$0xff]
    %v32 = vld [vmem:[%s1 + $0x60] sm:$0xff]
    %v33 = vld [vmem:[%s1 + $0x68] sm:$0xff]
    %v34 = vld [vmem:[%s1 + $0x70] sm:$0xff]
    %v35 = vld [vmem:[%s1 + $0x78] sm:$0xff]
    %vm36 = vcmask 261120
    %v38 = vsel %vm36, %v18, 0
    %40 = vmatpush.msra.mxu0 0.0
    %41 = vmatpush.msra.mxu0 0.0
    %42 = vmatpush.msra.mxu0 0.0
    %43 = vmatpush.msra.mxu0 0.0
    %44 = vmatpush.msra.mxu0 0.0
    %45 = vmatpush.msra.mxu0 0.0
    %46 = vmatpush.msra.mxu0 0.0
    %47 = vmatpush.msra.mxu0 0.0
    %48 = vmatpush.msra.mxu0 0.0
    %49 = vmatpush.msra.mxu0 0.0
    %50 = vmatpush.msra.mxu0 0.0
    %51 = vmatpush.msra.mxu0 0.0
    %52 = vmatpush.msra.mxu0 %v23
    %53 = vmatpush.msra.mxu0 %v22
    %54 = vmatpush.msra.mxu0 %v21
    %55 = vmatpush.msra.mxu0 %v20
    %56 = vmatmul.f32.gmra.mxu0 %v38
    %v57 = vpop.f32.mrf.mxu0
    %v58 = vadd.f32 0.0, %v57
    %59 = vdwg.mxu0
    %60 = vmatpush.msra.mxu0 0.0
    %61 = vmatpush.msra.mxu0 0.0
    %62 = vmatpush.msra.mxu0 0.0
    %63 = vmatpush.msra.mxu0 0.0
    %64 = vmatpush.msra.mxu0 0.0
    %65 = vmatpush.msra.mxu0 0.0
    %66 = vmatpush.msra.mxu0 0.0
    %67 = vmatpush.msra.mxu0 0.0
    %68 = vmatpush.msra.mxu0 0.0
    %69 = vmatpush.msra.mxu0 0.0
    %70 = vmatpush.msra.mxu0 0.0
    %71 = vmatpush.msra.mxu0 0.0
    %72 = vmatpush.msra.mxu0 %v27
    %73 = vmatpush.msra.mxu0 %v26
    %74 = vmatpush.msra.mxu0 %v25
    %75 = vmatpush.msra.mxu0 %v24
    %76 = vmatmul.f32.gmra.mxu0 %v38
    %v77 = vpop.f32.mrf.mxu0
    %v78 = vadd.f32 0.0, %v77
    %79 = vdwg.mxu0
    %80 = vmatpush.msra.mxu0 0.0
    %81 = vmatpush.msra.mxu0 0.0
    %82 = vmatpush.msra.mxu0 0.0
    %83 = vmatpush.msra.mxu0 0.0
    %84 = vmatpush.msra.mxu0 0.0
    %85 = vmatpush.msra.mxu0 0.0
    %86 = vmatpush.msra.mxu0 0.0
    %87 = vmatpush.msra.mxu0 0.0
    %88 = vmatpush.msra.mxu0 0.0
    %89 = vmatpush.msra.mxu0 0.0
    %90 = vmatpush.msra.mxu0 0.0
    %91 = vmatpush.msra.mxu0 0.0
    %92 = vmatpush.msra.mxu0 %v31
    %93 = vmatpush.msra.mxu0 %v30
    %94 = vmatpush.msra.mxu0 %v29
    %95 = vmatpush.msra.mxu0 %v28
    %96 = vmatmul.f32.gmra.mxu0 %v38
    %v97 = vpop.f32.mrf.mxu0
    %v98 = vadd.f32 0.0, %v97
    %99 = vdwg.mxu0
    %100 = vmatpush.msra.mxu0 0.0
    %101 = vmatpush.msra.mxu0 0.0
    %102 = vmatpush.msra.mxu0 0.0
    %103 = vmatpush.msra.mxu0 0.0
    %104 = vmatpush.msra.mxu0 0.0
    %105 = vmatpush.msra.mxu0 0.0
    %106 = vmatpush.msra.mxu0 0.0
    %107 = vmatpush.msra.mxu0 0.0
    %108 = vmatpush.msra.mxu0 0.0
    %109 = vmatpush.msra.mxu0 0.0
    %110 = vmatpush.msra.mxu0 0.0
    %111 = vmatpush.msra.mxu0 0.0
    %112 = vmatpush.msra.mxu0 %v35
    %113 = vmatpush.msra.mxu0 %v34
    %114 = vmatpush.msra.mxu0 %v33
    %115 = vmatpush.msra.mxu0 %v32
    %116 = vmatmul.f32.gmra.mxu0 %v38
    %v117 = vpop.f32.mrf.mxu0
    %v118 = vadd.f32 0.0, %v117
    %119 = vdwg.mxu0
    %v121 = vsel %vm36, %v19, 0
    %123 = vmatpush.msra.mxu0 0.0
    %124 = vmatpush.msra.mxu0 0.0
    %125 = vmatpush.msra.mxu0 0.0
    %126 = vmatpush.msra.mxu0 0.0
    %127 = vmatpush.msra.mxu0 0.0
    %128 = vmatpush.msra.mxu0 0.0
    %129 = vmatpush.msra.mxu0 0.0
    %130 = vmatpush.msra.mxu0 0.0
    %131 = vmatpush.msra.mxu0 0.0
    %132 = vmatpush.msra.mxu0 0.0
    %133 = vmatpush.msra.mxu0 0.0
    %134 = vmatpush.msra.mxu0 0.0
    %135 = vmatpush.msra.mxu0 %v23
    %136 = vmatpush.msra.mxu0 %v22
    %137 = vmatpush.msra.mxu0 %v21
    %138 = vmatpush.msra.mxu0 %v20
    %139 = vmatmul.f32.gmra.mxu0 %v121
    %v140 = vpop.f32.mrf.mxu0
    %v141 = vadd.f32 0.0, %v140
    %142 = vdwg.mxu0
    %143 = vmatpush.msra.mxu0 0.0
    %144 = vmatpush.msra.mxu0 0.0
    %145 = vmatpush.msra.mxu0 0.0
    %146 = vmatpush.msra.mxu0 0.0
    %147 = vmatpush.msra.mxu0 0.0
    %148 = vmatpush.msra.mxu0 0.0
    %149 = vmatpush.msra.mxu0 0.0
    %150 = vmatpush.msra.mxu0 0.0
    %151 = vmatpush.msra.mxu0 0.0
    %152 = vmatpush.msra.mxu0 0.0
    %153 = vmatpush.msra.mxu0 0.0
    %154 = vmatpush.msra.mxu0 0.0
    %155 = vmatpush.msra.mxu0 %v27
    %156 = vmatpush.msra.mxu0 %v26
    %157 = vmatpush.msra.mxu0 %v25
    %158 = vmatpush.msra.mxu0 %v24
    %159 = vmatmul.f32.gmra.mxu0 %v121
    %v160 = vpop.f32.mrf.mxu0
    %v161 = vadd.f32 0.0, %v160
    %162 = vdwg.mxu0
    %163 = vmatpush.msra.mxu0 0.0
    %164 = vmatpush.msra.mxu0 0.0
    %165 = vmatpush.msra.mxu0 0.0
    %166 = vmatpush.msra.mxu0 0.0
    %167 = vmatpush.msra.mxu0 0.0
    %168 = vmatpush.msra.mxu0 0.0
    %169 = vmatpush.msra.mxu0 0.0
    %170 = vmatpush.msra.mxu0 0.0
    %171 = vmatpush.msra.mxu0 0.0
    %172 = vmatpush.msra.mxu0 0.0
    %173 = vmatpush.msra.mxu0 0.0
    %174 = vmatpush.msra.mxu0 0.0
    %175 = vmatpush.msra.mxu0 %v31
    %176 = vmatpush.msra.mxu0 %v30
    %177 = vmatpush.msra.mxu0 %v29
    %178 = vmatpush.msra.mxu0 %v28
    %179 = vmatmul.f32.gmra.mxu0 %v121
    %v180 = vpop.f32.mrf.mxu0
    %v181 = vadd.f32 0.0, %v180
    %182 = vdwg.mxu0
    %183 = vmatpush.msra.mxu0 0.0
    %184 = vmatpush.msra.mxu0 0.0
    %185 = vmatpush.msra.mxu0 0.0
    %186 = vmatpush.msra.mxu0 0.0
    %187 = vmatpush.msra.mxu0 0.0
    %188 = vmatpush.msra.mxu0 0.0
    %189 = vmatpush.msra.mxu0 0.0
    %190 = vmatpush.msra.mxu0 0.0
    %191 = vmatpush.msra.mxu0 0.0
    %192 = vmatpush.msra.mxu0 0.0
    %193 = vmatpush.msra.mxu0 0.0
    %194 = vmatpush.msra.mxu0 0.0
    %195 = vmatpush.msra.mxu0 %v35
    %196 = vmatpush.msra.mxu0 %v34
    %197 = vmatpush.msra.mxu0 %v33
    %198 = vmatpush.msra.mxu0 %v32
    %199 = vmatmul.f32.gmra.mxu0 %v121
    %v200 = vpop.f32.mrf.mxu0
    %v201 = vadd.f32 0.0, %v200
    %202 = vdwg.mxu0
    %v203 = vld [vmem:[%s3] sm:$0xff]
    %v204 = vld [vmem:[%s3 + $0x8] sm:$0xff]
    %v205 = vld [vmem:[%s3 + $0x10] sm:$0xff]
    %v206 = vld [vmem:[%s3 + $0x18] sm:$0xff]
    %208 = vrot.lane.b32.xlu0 %v58, 120
    %v209 = vpop.permute.xlu0 %208
    %vm210 = vcmask 64512
    %v211 = vsel %vm210, %v58, 0
    %v213 = vsel %vm210, %v209, 0
    %215 = vmatpush.xpose.msra.mxu0 0.0
    %216 = vmatpush.xpose.msra.mxu0 0.0
    %217 = vmatpush.xpose.msra.mxu0 0.0
    %218 = vmatpush.xpose.msra.mxu0 0.0
    %219 = vmatpush.xpose.msra.mxu0 0.0
    %220 = vmatpush.xpose.msra.mxu0 0.0
    %221 = vmatpush.xpose.msra.mxu0 0.0
    %222 = vmatpush.xpose.msra.mxu0 0.0
    %223 = vmatpush.xpose.msra.mxu0 0.0
    %224 = vmatpush.xpose.msra.mxu0 0.0
    %225 = vmatpush.xpose.msra.mxu0 0.0
    %226 = vmatpush.xpose.msra.mxu0 0.0
    %227 = vmatpush.xpose.msra.mxu0 0.0
    %228 = vmatpush.xpose.msra.mxu0 0.0
    %229 = vmatpush.xpose.msra.mxu0 0.0
    %230 = vmatpush.xpose.msra.mxu0 %v213
    %231 = vmatmul.f32.gmra.mxu0 %v211
    %v232 = vpop.f32.mrf.mxu0
    %v233 = vadd.f32 %v203, %v232
    %234 = vdwg.mxu0
    %236 = vrot.lane.b32.xlu0 %v78, 120
    %v237 = vpop.permute.xlu0 %236
    %v238 = vsel %vm210, %v78, 0
    %v240 = vsel %vm210, %v237, 0
    %242 = vmatpush.xpose.msra.mxu0 0.0
    %243 = vmatpush.xpose.msra.mxu0 0.0
    %244 = vmatpush.xpose.msra.mxu0 0.0
    %245 = vmatpush.xpose.msra.mxu0 0.0
    %246 = vmatpush.xpose.msra.mxu0 0.0
    %247 = vmatpush.xpose.msra.mxu0 0.0
    %248 = vmatpush.xpose.msra.mxu0 0.0
    %249 = vmatpush.xpose.msra.mxu0 0.0
    %250 = vmatpush.xpose.msra.mxu0 0.0
    %251 = vmatpush.xpose.msra.mxu0 0.0
    %252 = vmatpush.xpose.msra.mxu0 0.0
    %253 = vmatpush.xpose.msra.mxu0 0.0
    %254 = vmatpush.xpose.msra.mxu0 0.0
    %255 = vmatpush.xpose.msra.mxu0 0.0
    %256 = vmatpush.xpose.msra.mxu0 0.0
    %257 = vmatpush.xpose.msra.mxu0 %v240
    %258 = vmatmul.f32.gmra.mxu0 %v238
    %v259 = vpop.f32.mrf.mxu0
    %v260 = vadd.f32 %v204, %v259
    %261 = vdwg.mxu0
    %263 = vrot.lane.b32.xlu0 %v98, 120
    %v264 = vpop.permute.xlu0 %263
    %v265 = vsel %vm210, %v98, 0
    %v267 = vsel %vm210, %v264, 0
    %269 = vmatpush.xpose.msra.mxu0 0.0
    %270 = vmatpush.xpose.msra.mxu0 0.0
    %271 = vmatpush.xpose.msra.mxu0 0.0
    %272 = vmatpush.xpose.msra.mxu0 0.0
    %273 = vmatpush.xpose.msra.mxu0 0.0
    %274 = vmatpush.xpose.msra.mxu0 0.0
    %275 = vmatpush.xpose.msra.mxu0 0.0
    %276 = vmatpush.xpose.msra.mxu0 0.0
    %277 = vmatpush.xpose.msra.mxu0 0.0
    %278 = vmatpush.xpose.msra.mxu0 0.0
    %279 = vmatpush.xpose.msra.mxu0 0.0
    %280 = vmatpush.xpose.msra.mxu0 0.0
    %281 = vmatpush.xpose.msra.mxu0 0.0
    %282 = vmatpush.xpose.msra.mxu0 0.0
    %283 = vmatpush.xpose.msra.mxu0 0.0
    %284 = vmatpush.xpose.msra.mxu0 %v267
    %285 = vmatmul.f32.gmra.mxu0 %v265
    %v286 = vpop.f32.mrf.mxu0
    %v287 = vadd.f32 %v205, %v286
    %288 = vdwg.mxu0
    %290 = vrot.lane.b32.xlu0 %v118, 120
    %v291 = vpop.permute.xlu0 %290
    %v292 = vsel %vm210, %v118, 0
    %v294 = vsel %vm210, %v291, 0
    %296 = vmatpush.xpose.msra.mxu0 0.0
    %297 = vmatpush.xpose.msra.mxu0 0.0
    %298 = vmatpush.xpose.msra.mxu0 0.0
    %299 = vmatpush.xpose.msra.mxu0 0.0
    %300 = vmatpush.xpose.msra.mxu0 0.0
    %301 = vmatpush.xpose.msra.mxu0 0.0
    %302 = vmatpush.xpose.msra.mxu0 0.0
    %303 = vmatpush.xpose.msra.mxu0 0.0
    %304 = vmatpush.xpose.msra.mxu0 0.0
    %305 = vmatpush.xpose.msra.mxu0 0.0
    %306 = vmatpush.xpose.msra.mxu0 0.0
    %307 = vmatpush.xpose.msra.mxu0 0.0
    %308 = vmatpush.xpose.msra.mxu0 0.0
    %309 = vmatpush.xpose.msra.mxu0 0.0
    %310 = vmatpush.xpose.msra.mxu0 0.0
    %311 = vmatpush.xpose.msra.mxu0 %v294
    %312 = vmatmul.f32.gmra.mxu0 %v292
    %v313 = vpop.f32.mrf.mxu0
    %v314 = vadd.f32 %v206, %v313
    %315 = vdwg.mxu0
    %317 = vrot.lane.b32.xlu0 %v141, 120
    %v318 = vpop.permute.xlu0 %317
    %v319 = vsel %vm210, %v141, 0
    %v321 = vsel %vm210, %v318, 0
    %323 = vmatpush.xpose.msra.mxu0 0.0
    %324 = vmatpush.xpose.msra.mxu0 0.0
    %325 = vmatpush.xpose.msra.mxu0 0.0
    %326 = vmatpush.xpose.msra.mxu0 0.0
    %327 = vmatpush.xpose.msra.mxu0 0.0
    %328 = vmatpush.xpose.msra.mxu0 0.0
    %329 = vmatpush.xpose.msra.mxu0 0.0
    %330 = vmatpush.xpose.msra.mxu0 0.0
    %331 = vmatpush.xpose.msra.mxu0 0.0
    %332 = vmatpush.xpose.msra.mxu0 0.0
    %333 = vmatpush.xpose.msra.mxu0 0.0
    %334 = vmatpush.xpose.msra.mxu0 0.0
    %335 = vmatpush.xpose.msra.mxu0 0.0
    %336 = vmatpush.xpose.msra.mxu0 0.0
    %337 = vmatpush.xpose.msra.mxu0 0.0
    %338 = vmatpush.xpose.msra.mxu0 %v321
    %339 = vmatmul.f32.gmra.mxu0 %v319
    %v340 = vpop.f32.mrf.mxu0
    %v341 = vadd.f32 %v203, %v340
    %342 = vdwg.mxu0
    %344 = vrot.lane.b32.xlu0 %v161, 120
    %v345 = vpop.permute.xlu0 %344
    %v346 = vsel %vm210, %v161, 0
    %v348 = vsel %vm210, %v345, 0
    %350 = vmatpush.xpose.msra.mxu0 0.0
    %351 = vmatpush.xpose.msra.mxu0 0.0
    %352 = vmatpush.xpose.msra.mxu0 0.0
    %353 = vmatpush.xpose.msra.mxu0 0.0
    %354 = vmatpush.xpose.msra.mxu0 0.0
    %355 = vmatpush.xpose.msra.mxu0 0.0
    %356 = vmatpush.xpose.msra.mxu0 0.0
    %357 = vmatpush.xpose.msra.mxu0 0.0
    %358 = vmatpush.xpose.msra.mxu0 0.0
    %359 = vmatpush.xpose.msra.mxu0 0.0
    %360 = vmatpush.xpose.msra.mxu0 0.0
    %361 = vmatpush.xpose.msra.mxu0 0.0
    %362 = vmatpush.xpose.msra.mxu0 0.0
    %363 = vmatpush.xpose.msra.mxu0 0.0
    %364 = vmatpush.xpose.msra.mxu0 0.0
    %365 = vmatpush.xpose.msra.mxu0 %v348
    %366 = vmatmul.f32.gmra.mxu0 %v346
    %v367 = vpop.f32.mrf.mxu0
    %v368 = vadd.f32 %v204, %v367
    %369 = vdwg.mxu0
    %371 = vrot.lane.b32.xlu0 %v181, 120
    %v372 = vpop.permute.xlu0 %371
    %v373 = vsel %vm210, %v181, 0
    %v375 = vsel %vm210, %v372, 0
    %377 = vmatpush.xpose.msra.mxu0 0.0
    %378 = vmatpush.xpose.msra.mxu0 0.0
    %379 = vmatpush.xpose.msra.mxu0 0.0
    %380 = vmatpush.xpose.msra.mxu0 0.0
    %381 = vmatpush.xpose.msra.mxu0 0.0
    %382 = vmatpush.xpose.msra.mxu0 0.0
    %383 = vmatpush.xpose.msra.mxu0 0.0
    %384 = vmatpush.xpose.msra.mxu0 0.0
    %385 = vmatpush.xpose.msra.mxu0 0.0
    %386 = vmatpush.xpose.msra.mxu0 0.0
    %387 = vmatpush.xpose.msra.mxu0 0.0
    %388 = vmatpush.xpose.msra.mxu0 0.0
    %389 = vmatpush.xpose.msra.mxu0 0.0
    %390 = vmatpush.xpose.msra.mxu0 0.0
    %391 = vmatpush.xpose.msra.mxu0 0.0
    %392 = vmatpush.xpose.msra.mxu0 %v375
    %393 = vmatmul.f32.gmra.mxu0 %v373
    %v394 = vpop.f32.mrf.mxu0
    %v395 = vadd.f32 %v205, %v394
    %396 = vdwg.mxu0
    %398 = vrot.lane.b32.xlu0 %v201, 120
    %v399 = vpop.permute.xlu0 %398
    %v400 = vsel %vm210, %v201, 0
    %v402 = vsel %vm210, %v399, 0
    %404 = vmatpush.xpose.msra.mxu0 0.0
    %405 = vmatpush.xpose.msra.mxu0 0.0
    %406 = vmatpush.xpose.msra.mxu0 0.0
    %407 = vmatpush.xpose.msra.mxu0 0.0
    %408 = vmatpush.xpose.msra.mxu0 0.0
    %409 = vmatpush.xpose.msra.mxu0 0.0
    %410 = vmatpush.xpose.msra.mxu0 0.0
    %411 = vmatpush.xpose.msra.mxu0 0.0
    %412 = vmatpush.xpose.msra.mxu0 0.0
    %413 = vmatpush.xpose.msra.mxu0 0.0
    %414 = vmatpush.xpose.msra.mxu0 0.0
    %415 = vmatpush.xpose.msra.mxu0 0.0
    %416 = vmatpush.xpose.msra.mxu0 0.0
    %417 = vmatpush.xpose.msra.mxu0 0.0
    %418 = vmatpush.xpose.msra.mxu0 0.0
    %419 = vmatpush.xpose.msra.mxu0 %v402
    %420 = vmatmul.f32.gmra.mxu0 %v400
    %v421 = vpop.f32.mrf.mxu0
    %v422 = vadd.f32 %v206, %v421
    %423 = vdwg.mxu0
    %v424 = vsel %vm210, %v233, -inf
    %425 = vmax.xlane.f32.xlu0 %v424
    %v426 = vpop.xlane.xlu0 %425
    %v427 = vsel %vm210, %v260, -inf
    %428 = vmax.xlane.f32.xlu0 %v427
    %v429 = vpop.xlane.xlu0 %428
    %v430 = vsel %vm210, %v287, -inf
    %431 = vmax.xlane.f32.xlu0 %v430
    %v432 = vpop.xlane.xlu0 %431
    %v433 = vsel %vm210, %v314, -inf
    %434 = vmax.xlane.f32.xlu0 %v433
    %v435 = vpop.xlane.xlu0 %434
    %v436 = vsel %vm210, %v341, -inf
    %437 = vmax.xlane.f32.xlu0 %v436
    %v438 = vpop.xlane.xlu0 %437
    %v439 = vsel %vm210, %v368, -inf
    %440 = vmax.xlane.f32.xlu0 %v439
    %v441 = vpop.xlane.xlu0 %440
    %v442 = vsel %vm210, %v395, -inf
    %443 = vmax.xlane.f32.xlu0 %v442
    %v444 = vpop.xlane.xlu0 %443
    %v445 = vsel %vm210, %v422, -inf
    %446 = vmax.xlane.f32.xlu0 %v445
    %v447 = vpop.xlane.xlu0 %446
    %v448 = vsub.f32 %v233, %v426
    %v449 = vsub.f32 %v260, %v429
    %v450 = vsub.f32 %v287, %v432
    %v451 = vsub.f32 %v314, %v435
    %v452 = vsub.f32 %v341, %v438
    %v453 = vsub.f32 %v368, %v441
    %v454 = vsub.f32 %v395, %v444
    %v455 = vsub.f32 %v422, %v447
    %v456 = vmul.f32 %v448, 1.442695
    %v457 = vpow.pop %v456
    %v458 = vmul.f32 %v449, 1.442695
    %v459 = vpow.pop %v458
    %v460 = vmul.f32 %v450, 1.442695
    %v461 = vpow.pop %v460
    %v462 = vmul.f32 %v451, 1.442695
    %v463 = vpow.pop %v462
    %v464 = vmul.f32 %v452, 1.442695
    %v465 = vpow.pop %v464
    %v466 = vmul.f32 %v453, 1.442695
    %v467 = vpow.pop %v466
    %v468 = vmul.f32 %v454, 1.442695
    %v469 = vpow.pop %v468
    %v470 = vmul.f32 %v455, 1.442695
    %v471 = vpow.pop %v470
    %v472 = vsel %vm210, %v457, 0.0
    %473 = vadd.xlane.f32.xlu0 %v472
    %v474 = vpop.xlane.xlu0 %473
    %v475 = vsel %vm210, %v459, 0.0
    %476 = vadd.xlane.f32.xlu0 %v475
    %v477 = vpop.xlane.xlu0 %476
    %v478 = vsel %vm210, %v461, 0.0
    %479 = vadd.xlane.f32.xlu0 %v478
    %v480 = vpop.xlane.xlu0 %479
    %v481 = vsel %vm210, %v463, 0.0
    %482 = vadd.xlane.f32.xlu0 %v481
    %v483 = vpop.xlane.xlu0 %482
    %v484 = vsel %vm210, %v465, 0.0
    %485 = vadd.xlane.f32.xlu0 %v484
    %v486 = vpop.xlane.xlu0 %485
    %v487 = vsel %vm210, %v467, 0.0
    %488 = vadd.xlane.f32.xlu0 %v487
    %v489 = vpop.xlane.xlu0 %488
    %v490 = vsel %vm210, %v469, 0.0
    %491 = vadd.xlane.f32.xlu0 %v490
    %v492 = vpop.xlane.xlu0 %491
    %v493 = vsel %vm210, %v471, 0.0
    %494 = vadd.xlane.f32.xlu0 %v493
    %v495 = vpop.xlane.xlu0 %494
    %v496 = vrcp.pop %v474
    %v497 = vrcp.pop %v477
    %v498 = vrcp.pop %v480
    %v499 = vrcp.pop %v483
    %v500 = vrcp.pop %v486
    %v501 = vrcp.pop %v489
    %v502 = vrcp.pop %v492
    %v503 = vrcp.pop %v495
    %v504 = vmul.f32 %v457, %v496
    %v505 = vmul.f32 %v459, %v497
    %v506 = vmul.f32 %v461, %v498
    %v507 = vmul.f32 %v463, %v499
    %v508 = vmul.f32 %v465, %v500
    %v509 = vmul.f32 %v467, %v501
    %v510 = vmul.f32 %v469, %v502
    %v511 = vmul.f32 %v471, %v503
    %512 = vrot.lane.b32.xlu0 %v58, 112
    %v513 = vpop.permute.xlu0 %512
    %v516 = vsel %vm210, %v504, 0
    %518 = vmatpush.msra.mxu0 0.0
    %519 = vmatpush.msra.mxu0 0.0
    %520 = vmatpush.msra.mxu0 0.0
    %521 = vmatpush.msra.mxu0 0.0
    %522 = vmatpush.msra.mxu0 0.0
    %523 = vmatpush.msra.mxu0 0.0
    %524 = vmatpush.msra.mxu0 0.0
    %525 = vmatpush.msra.mxu0 0.0
    %526 = vmatpush.msra.mxu0 0.0
    %527 = vmatpush.msra.mxu0 0.0
    %528 = vmatpush.msra.mxu0 0.0
    %529 = vmatpush.msra.mxu0 0.0
    %530 = vmatpush.msra.mxu0 0.0
    %531 = vmatpush.msra.mxu0 0.0
    %532 = vmatpush.msra.mxu0 0.0
    %533 = vmatpush.msra.mxu0 %v513
    %534 = vmatmul.f32.gmra.mxu0 %v516
    %v535 = vpop.f32.mrf.mxu0
    %v536 = vadd.f32 0.0, %v535
    %537 = vdwg.mxu0
    %538 = vrot.lane.b32.xlu0 %v78, 112
    %v539 = vpop.permute.xlu0 %538
    %v542 = vsel %vm210, %v505, 0
    %544 = vmatpush.msra.mxu0 0.0
    %545 = vmatpush.msra.mxu0 0.0
    %546 = vmatpush.msra.mxu0 0.0
    %547 = vmatpush.msra.mxu0 0.0
    %548 = vmatpush.msra.mxu0 0.0
    %549 = vmatpush.msra.mxu0 0.0
    %550 = vmatpush.msra.mxu0 0.0
    %551 = vmatpush.msra.mxu0 0.0
    %552 = vmatpush.msra.mxu0 0.0
    %553 = vmatpush.msra.mxu0 0.0
    %554 = vmatpush.msra.mxu0 0.0
    %555 = vmatpush.msra.mxu0 0.0
    %556 = vmatpush.msra.mxu0 0.0
    %557 = vmatpush.msra.mxu0 0.0
    %558 = vmatpush.msra.mxu0 0.0
    %559 = vmatpush.msra.mxu0 %v539
    %560 = vmatmul.f32.gmra.mxu0 %v542
    %v561 = vpop.f32.mrf.mxu0
    %v562 = vadd.f32 0.0, %v561
    %563 = vdwg.mxu0
    %564 = vrot.lane.b32.xlu0 %v98, 112
    %v565 = vpop.permute.xlu0 %564
    %v568 = vsel %vm210, %v506, 0
    %570 = vmatpush.msra.mxu0 0.0
    %571 = vmatpush.msra.mxu0 0.0
    %572 = vmatpush.msra.mxu0 0.0
    %573 = vmatpush.msra.mxu0 0.0
    %574 = vmatpush.msra.mxu0 0.0
    %575 = vmatpush.msra.mxu0 0.0
    %576 = vmatpush.msra.mxu0 0.0
    %577 = vmatpush.msra.mxu0 0.0
    %578 = vmatpush.msra.mxu0 0.0
    %579 = vmatpush.msra.mxu0 0.0
    %580 = vmatpush.msra.mxu0 0.0
    %581 = vmatpush.msra.mxu0 0.0
    %582 = vmatpush.msra.mxu0 0.0
    %583 = vmatpush.msra.mxu0 0.0
    %584 = vmatpush.msra.mxu0 0.0
    %585 = vmatpush.msra.mxu0 %v565
    %586 = vmatmul.f32.gmra.mxu0 %v568
    %v587 = vpop.f32.mrf.mxu0
    %v588 = vadd.f32 0.0, %v587
    %589 = vdwg.mxu0
    %590 = vrot.lane.b32.xlu0 %v118, 112
    %v591 = vpop.permute.xlu0 %590
    %v594 = vsel %vm210, %v507, 0
    %596 = vmatpush.msra.mxu0 0.0
    %597 = vmatpush.msra.mxu0 0.0
    %598 = vmatpush.msra.mxu0 0.0
    %599 = vmatpush.msra.mxu0 0.0
    %600 = vmatpush.msra.mxu0 0.0
    %601 = vmatpush.msra.mxu0 0.0
    %602 = vmatpush.msra.mxu0 0.0
    %603 = vmatpush.msra.mxu0 0.0
    %604 = vmatpush.msra.mxu0 0.0
    %605 = vmatpush.msra.mxu0 0.0
    %606 = vmatpush.msra.mxu0 0.0
    %607 = vmatpush.msra.mxu0 0.0
    %608 = vmatpush.msra.mxu0 0.0
    %609 = vmatpush.msra.mxu0 0.0
    %610 = vmatpush.msra.mxu0 0.0
    %611 = vmatpush.msra.mxu0 %v591
    %612 = vmatmul.f32.gmra.mxu0 %v594
    %v613 = vpop.f32.mrf.mxu0
    %v614 = vadd.f32 0.0, %v613
    %615 = vdwg.mxu0
    %616 = vrot.lane.b32.xlu0 %v141, 112
    %v617 = vpop.permute.xlu0 %616
    %v620 = vsel %vm210, %v508, 0
    %622 = vmatpush.msra.mxu0 0.0
    %623 = vmatpush.msra.mxu0 0.0
    %624 = vmatpush.msra.mxu0 0.0
    %625 = vmatpush.msra.mxu0 0.0
    %626 = vmatpush.msra.mxu0 0.0
    %627 = vmatpush.msra.mxu0 0.0
    %628 = vmatpush.msra.mxu0 0.0
    %629 = vmatpush.msra.mxu0 0.0
    %630 = vmatpush.msra.mxu0 0.0
    %631 = vmatpush.msra.mxu0 0.0
    %632 = vmatpush.msra.mxu0 0.0
    %633 = vmatpush.msra.mxu0 0.0
    %634 = vmatpush.msra.mxu0 0.0
    %635 = vmatpush.msra.mxu0 0.0
    %636 = vmatpush.msra.mxu0 0.0
    %637 = vmatpush.msra.mxu0 %v617
    %638 = vmatmul.f32.gmra.mxu0 %v620
    %v639 = vpop.f32.mrf.mxu0
    %v640 = vadd.f32 0.0, %v639
    %641 = vdwg.mxu0
    %642 = vrot.lane.b32.xlu0 %v161, 112
    %v643 = vpop.permute.xlu0 %642
    %v646 = vsel %vm210, %v509, 0
    %648 = vmatpush.msra.mxu0 0.0
    %649 = vmatpush.msra.mxu0 0.0
    %650 = vmatpush.msra.mxu0 0.0
    %651 = vmatpush.msra.mxu0 0.0
    %652 = vmatpush.msra.mxu0 0.0
    %653 = vmatpush.msra.mxu0 0.0
    %654 = vmatpush.msra.mxu0 0.0
    %655 = vmatpush.msra.mxu0 0.0
    %656 = vmatpush.msra.mxu0 0.0
    %657 = vmatpush.msra.mxu0 0.0
    %658 = vmatpush.msra.mxu0 0.0
    %659 = vmatpush.msra.mxu0 0.0
    %660 = vmatpush.msra.mxu0 0.0
    %661 = vmatpush.msra.mxu0 0.0
    %662 = vmatpush.msra.mxu0 0.0
    %663 = vmatpush.msra.mxu0 %v643
    %664 = vmatmul.f32.gmra.mxu0 %v646
    %v665 = vpop.f32.mrf.mxu0
    %v666 = vadd.f32 0.0, %v665
    %667 = vdwg.mxu0
    %668 = vrot.lane.b32.xlu0 %v181, 112
    %v669 = vpop.permute.xlu0 %668
    %v672 = vsel %vm210, %v510, 0
    %674 = vmatpush.msra.mxu0 0.0
    %675 = vmatpush.msra.mxu0 0.0
    %676 = vmatpush.msra.mxu0 0.0
    %677 = vmatpush.msra.mxu0 0.0
    %678 = vmatpush.msra.mxu0 0.0
    %679 = vmatpush.msra.mxu0 0.0
    %680 = vmatpush.msra.mxu0 0.0
    %681 = vmatpush.msra.mxu0 0.0
    %682 = vmatpush.msra.mxu0 0.0
    %683 = vmatpush.msra.mxu0 0.0
    %684 = vmatpush.msra.mxu0 0.0
    %685 = vmatpush.msra.mxu0 0.0
    %686 = vmatpush.msra.mxu0 0.0
    %687 = vmatpush.msra.mxu0 0.0
    %688 = vmatpush.msra.mxu0 0.0
    %689 = vmatpush.msra.mxu0 %v669
    %690 = vmatmul.f32.gmra.mxu0 %v672
    %v691 = vpop.f32.mrf.mxu0
    %v692 = vadd.f32 0.0, %v691
    %693 = vdwg.mxu0
    %694 = vrot.lane.b32.xlu0 %v201, 112
    %v695 = vpop.permute.xlu0 %694
    %v698 = vsel %vm210, %v511, 0
    %700 = vmatpush.msra.mxu0 0.0
    %701 = vmatpush.msra.mxu0 0.0
    %702 = vmatpush.msra.mxu0 0.0
    %703 = vmatpush.msra.mxu0 0.0
    %704 = vmatpush.msra.mxu0 0.0
    %705 = vmatpush.msra.mxu0 0.0
    %706 = vmatpush.msra.mxu0 0.0
    %707 = vmatpush.msra.mxu0 0.0
    %708 = vmatpush.msra.mxu0 0.0
    %709 = vmatpush.msra.mxu0 0.0
    %710 = vmatpush.msra.mxu0 0.0
    %711 = vmatpush.msra.mxu0 0.0
    %712 = vmatpush.msra.mxu0 0.0
    %713 = vmatpush.msra.mxu0 0.0
    %714 = vmatpush.msra.mxu0 0.0
    %715 = vmatpush.msra.mxu0 %v695
    %716 = vmatmul.f32.gmra.mxu0 %v698
    %v717 = vpop.f32.mrf.mxu0
    %v718 = vadd.f32 0.0, %v717
    %719 = vdwg.mxu0
    %v720 = vld [vmem:[%s2] sm:$0xff]
    %v721 = vld [vmem:[%s2 + $0x8] sm:$0xff]
    %v722 = vld [vmem:[%s2 + $0x10] sm:$0xff]
    %v723 = vld [vmem:[%s2 + $0x18] sm:$0xff]
    %v725 = vsel %vm210, %v536, 0
    %727 = vmatpush.msra.mxu0 0.0
    %728 = vmatpush.msra.mxu0 0.0
    %729 = vmatpush.msra.mxu0 0.0
    %730 = vmatpush.msra.mxu0 0.0
    %731 = vmatpush.msra.mxu0 0.0
    %732 = vmatpush.msra.mxu0 0.0
    %733 = vmatpush.msra.mxu0 0.0
    %734 = vmatpush.msra.mxu0 0.0
    %735 = vmatpush.msra.mxu0 0.0
    %736 = vmatpush.msra.mxu0 0.0
    %737 = vmatpush.msra.mxu0 0.0
    %738 = vmatpush.msra.mxu0 0.0
    %739 = vmatpush.msra.mxu0 0.0
    %740 = vmatpush.msra.mxu0 0.0
    %741 = vmatpush.msra.mxu0 0.0
    %742 = vmatpush.msra.mxu0 %v720
    %743 = vmatmul.f32.gmra.mxu0 %v725
    %v744 = vpop.f32.mrf.mxu0
    %v745 = vadd.f32 0.0, %v744
    %746 = vdwg.mxu0
    %v748 = vsel %vm210, %v562, 0
    %750 = vmatpush.msra.mxu0 0.0
    %751 = vmatpush.msra.mxu0 0.0
    %752 = vmatpush.msra.mxu0 0.0
    %753 = vmatpush.msra.mxu0 0.0
    %754 = vmatpush.msra.mxu0 0.0
    %755 = vmatpush.msra.mxu0 0.0
    %756 = vmatpush.msra.mxu0 0.0
    %757 = vmatpush.msra.mxu0 0.0
    %758 = vmatpush.msra.mxu0 0.0
    %759 = vmatpush.msra.mxu0 0.0
    %760 = vmatpush.msra.mxu0 0.0
    %761 = vmatpush.msra.mxu0 0.0
    %762 = vmatpush.msra.mxu0 0.0
    %763 = vmatpush.msra.mxu0 0.0
    %764 = vmatpush.msra.mxu0 0.0
    %765 = vmatpush.msra.mxu0 %v721
    %766 = vmatmul.f32.gmra.mxu0 %v748
    %v767 = vpop.f32.mrf.mxu0
    %v768 = vadd.f32 0.0, %v767
    %769 = vdwg.mxu0
    %v771 = vsel %vm210, %v588, 0
    %773 = vmatpush.msra.mxu0 0.0
    %774 = vmatpush.msra.mxu0 0.0
    %775 = vmatpush.msra.mxu0 0.0
    %776 = vmatpush.msra.mxu0 0.0
    %777 = vmatpush.msra.mxu0 0.0
    %778 = vmatpush.msra.mxu0 0.0
    %779 = vmatpush.msra.mxu0 0.0
    %780 = vmatpush.msra.mxu0 0.0
    %781 = vmatpush.msra.mxu0 0.0
    %782 = vmatpush.msra.mxu0 0.0
    %783 = vmatpush.msra.mxu0 0.0
    %784 = vmatpush.msra.mxu0 0.0
    %785 = vmatpush.msra.mxu0 0.0
    %786 = vmatpush.msra.mxu0 0.0
    %787 = vmatpush.msra.mxu0 0.0
    %788 = vmatpush.msra.mxu0 %v722
    %789 = vmatmul.f32.gmra.mxu0 %v771
    %v790 = vpop.f32.mrf.mxu0
    %v791 = vadd.f32 0.0, %v790
    %792 = vdwg.mxu0
    %v794 = vsel %vm210, %v614, 0
    %796 = vmatpush.msra.mxu0 0.0
    %797 = vmatpush.msra.mxu0 0.0
    %798 = vmatpush.msra.mxu0 0.0
    %799 = vmatpush.msra.mxu0 0.0
    %800 = vmatpush.msra.mxu0 0.0
    %801 = vmatpush.msra.mxu0 0.0
    %802 = vmatpush.msra.mxu0 0.0
    %803 = vmatpush.msra.mxu0 0.0
    %804 = vmatpush.msra.mxu0 0.0
    %805 = vmatpush.msra.mxu0 0.0
    %806 = vmatpush.msra.mxu0 0.0
    %807 = vmatpush.msra.mxu0 0.0
    %808 = vmatpush.msra.mxu0 0.0
    %809 = vmatpush.msra.mxu0 0.0
    %810 = vmatpush.msra.mxu0 0.0
    %811 = vmatpush.msra.mxu0 %v723
    %812 = vmatmul.f32.gmra.mxu0 %v794
    %v813 = vpop.f32.mrf.mxu0
    %v814 = vadd.f32 0.0, %v813
    %815 = vdwg.mxu0
    %v817 = vsel %vm210, %v640, 0
    %819 = vmatpush.msra.mxu0 0.0
    %820 = vmatpush.msra.mxu0 0.0
    %821 = vmatpush.msra.mxu0 0.0
    %822 = vmatpush.msra.mxu0 0.0
    %823 = vmatpush.msra.mxu0 0.0
    %824 = vmatpush.msra.mxu0 0.0
    %825 = vmatpush.msra.mxu0 0.0
    %826 = vmatpush.msra.mxu0 0.0
    %827 = vmatpush.msra.mxu0 0.0
    %828 = vmatpush.msra.mxu0 0.0
    %829 = vmatpush.msra.mxu0 0.0
    %830 = vmatpush.msra.mxu0 0.0
    %831 = vmatpush.msra.mxu0 0.0
    %832 = vmatpush.msra.mxu0 0.0
    %833 = vmatpush.msra.mxu0 0.0
    %834 = vmatpush.msra.mxu0 %v720
    %835 = vmatmul.f32.gmra.mxu0 %v817
    %v836 = vpop.f32.mrf.mxu0
    %v837 = vadd.f32 0.0, %v836
    %838 = vdwg.mxu0
    %v840 = vsel %vm210, %v666, 0
    %842 = vmatpush.msra.mxu0 0.0
    %843 = vmatpush.msra.mxu0 0.0
    %844 = vmatpush.msra.mxu0 0.0
    %845 = vmatpush.msra.mxu0 0.0
    %846 = vmatpush.msra.mxu0 0.0
    %847 = vmatpush.msra.mxu0 0.0
    %848 = vmatpush.msra.mxu0 0.0
    %849 = vmatpush.msra.mxu0 0.0
    %850 = vmatpush.msra.mxu0 0.0
    %851 = vmatpush.msra.mxu0 0.0
    %852 = vmatpush.msra.mxu0 0.0
    %853 = vmatpush.msra.mxu0 0.0
    %854 = vmatpush.msra.mxu0 0.0
    %855 = vmatpush.msra.mxu0 0.0
    %856 = vmatpush.msra.mxu0 0.0
    %857 = vmatpush.msra.mxu0 %v721
    %858 = vmatmul.f32.gmra.mxu0 %v840
    %v859 = vpop.f32.mrf.mxu0
    %v860 = vadd.f32 0.0, %v859
    %861 = vdwg.mxu0
    %v863 = vsel %vm210, %v692, 0
    %865 = vmatpush.msra.mxu0 0.0
    %866 = vmatpush.msra.mxu0 0.0
    %867 = vmatpush.msra.mxu0 0.0
    %868 = vmatpush.msra.mxu0 0.0
    %869 = vmatpush.msra.mxu0 0.0
    %870 = vmatpush.msra.mxu0 0.0
    %871 = vmatpush.msra.mxu0 0.0
    %872 = vmatpush.msra.mxu0 0.0
    %873 = vmatpush.msra.mxu0 0.0
    %874 = vmatpush.msra.mxu0 0.0
    %875 = vmatpush.msra.mxu0 0.0
    %876 = vmatpush.msra.mxu0 0.0
    %877 = vmatpush.msra.mxu0 0.0
    %878 = vmatpush.msra.mxu0 0.0
    %879 = vmatpush.msra.mxu0 0.0
    %880 = vmatpush.msra.mxu0 %v722
    %881 = vmatmul.f32.gmra.mxu0 %v863
    %v882 = vpop.f32.mrf.mxu0
    %v883 = vadd.f32 0.0, %v882
    %884 = vdwg.mxu0
    %v886 = vsel %vm210, %v718, 0
    %888 = vmatpush.msra.mxu0 0.0
    %889 = vmatpush.msra.mxu0 0.0
    %890 = vmatpush.msra.mxu0 0.0
    %891 = vmatpush.msra.mxu0 0.0
    %892 = vmatpush.msra.mxu0 0.0
    %893 = vmatpush.msra.mxu0 0.0
    %894 = vmatpush.msra.mxu0 0.0
    %895 = vmatpush.msra.mxu0 0.0
    %896 = vmatpush.msra.mxu0 0.0
    %897 = vmatpush.msra.mxu0 0.0
    %898 = vmatpush.msra.mxu0 0.0
    %899 = vmatpush.msra.mxu0 0.0
    %900 = vmatpush.msra.mxu0 0.0
    %901 = vmatpush.msra.mxu0 0.0
    %902 = vmatpush.msra.mxu0 0.0
    %903 = vmatpush.msra.mxu0 %v723
    %904 = vmatmul.f32.gmra.mxu0 %v886
    %v905 = vpop.f32.mrf.mxu0
    %v906 = vadd.f32 0.0, %v905
    %907 = vdwg.mxu0
    %v908 = vsel %vm36, %v745, 0.0
    %v909 = vsel %vm36, %v768, 0.0
    %v910 = vadd.f32 %v908, %v909
    %v911 = vsel %vm36, %v791, 0.0
    %v912 = vadd.f32 %v910, %v911
    %v913 = vsel %vm36, %v814, 0.0
    %v914 = vadd.f32 %v912, %v913
    %v915 = vsel %vm36, %v837, 0.0
    %v916 = vsel %vm36, %v860, 0.0
    %v917 = vadd.f32 %v915, %v916
    %v918 = vsel %vm36, %v883, 0.0
    %v919 = vadd.f32 %v917, %v918
    %v920 = vsel %vm36, %v906, 0.0
    %v921 = vadd.f32 %v919, %v920
    %922 = vst.msk [vmem:[#allocation2] sm:$0xff] %vm36, %v914
    %923 = vst.msk [vmem:[#allocation2 + $0x8] sm:$0xff] %vm36, %v921
    // Predicated region
    $region18: #{tpu_custom_call.1} parent=1 // pred_check
      _
    $region19: #{tpu_custom_call.1} parent=1 // pred_check_branch
      %925 = sbr.rel (0) target = $region21
    $region20: #{tpu_custom_call.1} parent=1 // pred_region
      %927 = vsyncadd [#allocation3], 0
      %s928 = sshll.u32 [#allocation2], 4
      %s929 = int_to_ptr.vmem [resolvable:$true] %s928
      %s930 = sshll.u32 %s4, 4
      %s931 = int_to_ptr.hbm [resolvable:$true] %s930
      %936 = dma.vmem_to_hbm [thread:$0]  %s929, 256, %s931, [#allocation3], 128, 128, 8
    $region21: #{tpu_custom_call.1} parent=1 // pred_fallthru
      _
    // Predicated region
    $region22: #{tpu_custom_call.1} parent=1 // pred_check
      _
    $region23: #{tpu_custom_call.1} parent=1 // pred_check_branch
      %938 = sbr.rel (0) target = $region25
    $region24: #{tpu_custom_call.1} parent=1 // pred_region
      %940 = dma.done [#allocation3], 256
    $region25: #{tpu_custom_call.1} parent=1 // pred_fallthru
      _
    %941 = vsyncpa [#allocation3], 1

</llo_original>
